<compile_context>
chip_gen: v5e
topology: v5e:2x2
jax: 0.10.0
libtpu: 0.0.40
codegen_flags: <defaults>
</compile_context>

<pallas_src>
import functools

import jax
import jax.numpy as jnp
from jax.experimental import pallas as pl
from jax.experimental.pallas import tpu as pltpu


def _round_up(a: int, b: int) -> int:
    return -(-a // b) * b


def _gat_kernel(x_ref, adj_ref, xsum_ref, w_ref, o_ref, agg_ref, *,
                inv_n: float, deg_col: int, x_resident: bool):
    """Grid: (node-row tiles [parallel], neighbour-column tiles [reduction])."""
    j = pl.program_id(1)

    @pl.when(j == 0)
    def _():
        agg_ref[...] = jnp.zeros_like(agg_ref)

    # Raw 0/1 adjacency tile: a single widening cast (int8 -> compute dtype) and
    # straight into the MXU.  No masking / normalisation / softmax work per tile.
    adj = adj_ref[...].astype(x_ref.dtype)            # (bm, bk)
    bk = adj.shape[1]
    if x_resident:
        start = pl.multiple_of(j * bk, bk)
        xblk = x_ref[pl.ds(start, bk), :]             # slice the resident x
    else:
        xblk = x_ref[...]                             # streamed (bk, C_pad) tile

    # agg += adj @ x_aug.  x_aug carries a ones-column, so agg[:, deg_col] is the
    # exact (f32-accumulated) row degree -- no extra reduction pass needed.
    agg_ref[...] += jnp.dot(adj, xblk, preferred_element_type=jnp.float32)

    @pl.when(j == pl.num_programs(1) - 1)
    def _():
        # Epilogue, once per row tile: attention normalisation + head-fused linear.
        agg = agg_ref[...]                            # (bm, C_pad) f32
        deg = agg[:, deg_col:deg_col + 1]             # (bm, 1) exact degrees
        has_nbr = deg > 0.0
        inv_deg = jnp.where(has_nbr, 1.0 / jnp.maximum(deg, 1.0), 0.0)
        iso = jnp.where(has_nbr, 0.0, jnp.float32(inv_n))
        # Rows with neighbours: agg / deg.  Isolated rows: uniform softmax -> mean
        # of all node features (colsum(x) / N), matching the reference exactly.
        normed = agg * inv_deg + iso * xsum_ref[...]  # (bm, C_pad) f32
        # Lane-dense, head-fused linear, fully in f32 (weights resident in f32).
        o_ref[...] = jnp.dot(normed, w_ref[...], preferred_element_type=jnp.float32)


def gat_layer(x, edge_index, linear_weight, query_weight, key_weight, *,
              num_nodes: int, leakyrelu_slope: float = 0.2,
              compute_dtype=jnp.bfloat16, adj_dtype=jnp.int8, block: int = 512,
              x_resident_bytes: int = 4 << 20):
    """Pallas implementation of GATLayer.forward -> (N, num_heads * out_channels)."""
    # query/key weights and the LeakyReLU slope provably do not influence the
    # forward output (softmax shift-invariance + the -1e9 mask underflow); kept in
    # the signature only for parity with the PyTorch module parameters.
    del query_weight, key_weight, leakyrelu_slope

    H, C_in, C_out = linear_weight.shape
    assert C_in == C_out, "reference PyTorch module requires in_channels == out_channels"
    N = num_nodes
    HC = H * C_out

    # ---- padded / fused layouts (wrapper-side layout plumbing is free) --------
    deg_col = C_in                                   # ones-column index in x_aug
    C_pad = _round_up(C_in + 1, 128)                 # lane-aligned feature width
    HC_pad = _round_up(HC, 128)                      # lane-dense output stores

    # Row tile: multiple of 32 (int8 sublane-native), >=2 row tiles when N > 32 so
    # the "parallel" axis shards across v7x's two TensorCores.  Column tile: the
    # neighbour/reduction axis, multiple of 128.
    bm = min(_round_up(block, 32), _round_up(-(-N // 2), 32))
    bk = min(_round_up(block, 128), _round_up(N, 128))
    n_pad_r = _round_up(N, bm)
    n_pad_c = _round_up(N, bk)

    # to_dense_adj equivalent: binary int8 adjacency scattered straight into the
    # padded buffer (halves the dominant HBM stream vs. bf16/f32; no extra pad op).
    adj = jnp.zeros((n_pad_r, n_pad_c), adj_dtype).at[
        edge_index[0], edge_index[1]].set(jnp.asarray(1, adj_dtype))

    # x augmented with a ones column (in-kernel exact degrees via the MXU),
    # zero-padded to the lane-aligned width and padded row count.
    x_aug = jnp.concatenate(
        [x.astype(compute_dtype), jnp.ones((N, 1), compute_dtype)], axis=1)
    x_p = jnp.zeros((n_pad_c, C_pad), compute_dtype).at[:N, :C_in + 1].set(x_aug)

    # Column sums of x over the real nodes (isolated-row uniform-softmax term),
    # computed once in f32 and passed as a tiny resident input.
    xsum = jnp.zeros((1, C_pad), jnp.float32).at[0, :C_in].set(
        jnp.sum(x.astype(jnp.float32), axis=0))

    # Head-fused weights, pre-transposed:  w_all[b, h*C + a] = linear_weight[h, a, b].
    # Kept in f32 (resident, small) so the epilogue matmul has no bf16 rounding.
    w_all = jnp.transpose(linear_weight, (2, 0, 1)).reshape(C_in, HC)
    w_p = jnp.zeros((C_pad, HC_pad), jnp.float32).at[:C_in, :HC].set(
        w_all.astype(jnp.float32))

    # Keep x fully resident in VMEM when small enough; otherwise stream per tile.
    x_item = jnp.dtype(compute_dtype).itemsize
    x_resident = (n_pad_c * C_pad * x_item) <= x_resident_bytes
    if x_resident:
        x_spec = pl.BlockSpec((n_pad_c, C_pad), lambda i, j: (0, 0))   # resident
    else:
        x_spec = pl.BlockSpec((bk, C_pad), lambda i, j: (j, 0))        # streamed

    kernel = functools.partial(_gat_kernel, inv_n=1.0 / N, deg_col=deg_col,
                               x_resident=x_resident)

    adj_item = jnp.dtype(adj_dtype).itemsize
    n_row_tiles = n_pad_r // bm
    x_bytes = (n_pad_c if x_resident else n_row_tiles * n_pad_c) * C_pad * x_item
    cost = pl.CostEstimate(
        flops=int(2 * n_pad_r * n_pad_c * C_pad + 2 * n_pad_r * C_pad * HC_pad),
        transcendentals=0,
        bytes_accessed=int(n_pad_r * n_pad_c * adj_item + x_bytes
                           + n_pad_r * HC_pad * 4 + C_pad * HC_pad * 4),
    )

    out = pl.pallas_call(
        kernel,
        out_shape=jax.ShapeDtypeStruct((n_pad_r, HC_pad), jnp.float32),
        grid_spec=pltpu.PrefetchScalarGridSpec(
            num_scalar_prefetch=0,
            grid=(n_row_tiles, n_pad_c // bk),       # (row tiles, neighbour tiles)
            in_specs=[
                x_spec,                                             # node features
                pl.BlockSpec((bm, bk), lambda i, j: (i, j)),        # adjacency stream
                pl.BlockSpec((1, C_pad), lambda i, j: (0, 0)),      # colsum(x), resident
                pl.BlockSpec((C_pad, HC_pad), lambda i, j: (0, 0)), # fused weights, resident
            ],
            out_specs=pl.BlockSpec((bm, HC_pad), lambda i, j: (i, 0)),
            scratch_shapes=[pltpu.VMEM((bm, C_pad), jnp.float32)],  # f32 accumulator
        ),
        compiler_params=pltpu.CompilerParams(
            # Row tiles shard across TensorCores; neighbour axis is a reduction.
            # Tiles stay well inside the default scoped-VMEM limit on v5e/v6e/v7x.
            dimension_semantics=("parallel", "arbitrary")),
        cost_estimate=cost,
    )(x_p, adj, xsum, w_p)

    return out[:N, :HC]


def gat_layer_ref(x, edge_index, linear_weight, query_weight, key_weight, *,
                  num_nodes: int, leakyrelu_slope: float = 0.2):
    """Plain-JAX faithful transcription of the PyTorch forward, for verification."""
    N = num_nodes
    H, C_in, C_out = linear_weight.shape
    adj = jnp.zeros((N, N), jnp.float32).at[edge_index[0], edge_index[1]].add(1.0)
    lti = jnp.matmul(linear_weight, x.T[None])                 # (H, C, N)
    q = jnp.matmul(query_weight, lti)                          # (H, 1, N)
    k = jnp.matmul(key_weight, lti)                            # (H, 1, N)
    v = jnp.transpose(lti, (0, 2, 1))                          # (H, N, C)
    e = jnp.matmul(q, jnp.transpose(k, (0, 2, 1)))             # (H, 1, 1)
    e = jnp.where(e >= 0, e, leakyrelu_slope * e)              # LeakyReLU
    att = jnp.where(adj[None] == 0.0, jnp.float32(-1e9), e)    # (H, N, N)
    att = jax.nn.softmax(att, axis=2)
    out = jnp.matmul(att, v)                                   # (H, N, C)
    return jnp.transpose(out, (1, 0, 2)).reshape(N, H * C_out)


if __name__ == "__main__":
    num_nodes = 16
    num_heads = 4
    in_channels = out_channels = 8

    key = jax.random.PRNGKey(0)
    k_x, k_lw, k_qw, k_kw = jax.random.split(key, 4)

    x = jax.random.normal(k_x, (num_nodes, in_channels), dtype=jnp.float32)
    linear_weight = jax.random.normal(
        k_lw, (num_heads, in_channels, out_channels), dtype=jnp.float32)
    query_weight = jax.random.normal(
        k_qw, (num_heads, 1, out_channels), dtype=jnp.float32)
    key_weight = jax.random.normal(
        k_kw, (num_heads, 1, out_channels), dtype=jnp.float32)

    # Deterministic graph: bidirectional ring over nodes 0..14; node 15 is left
    # isolated to exercise the zero-degree (uniform softmax) path.
    src = jnp.arange(num_nodes - 1, dtype=jnp.int32)
    dst = (src + 1) % (num_nodes - 1)
    edge_index = jnp.concatenate(
        [jnp.stack([src, dst], axis=0), jnp.stack([dst, src], axis=0)], axis=1)

    ref = gat_layer_ref(x, edge_index, linear_weight, query_weight, key_weight,
                        num_nodes=num_nodes, leakyrelu_slope=0.2)

    out_f32 = gat_layer(x, edge_index, linear_weight, query_weight, key_weight,
                        num_nodes=num_nodes, leakyrelu_slope=0.2,
                        compute_dtype=jnp.float32)
    out_f32 = jax.block_until_ready(out_f32)

    out_bf16 = gat_layer(x, edge_index, linear_weight, query_weight, key_weight,
                         num_nodes=num_nodes, leakyrelu_slope=0.2,
                         compute_dtype=jnp.bfloat16)
    out_bf16 = jax.block_until_ready(out_bf16)

    def nerr(a, b):
        return float(jnp.max(jnp.abs(a - b)) / (jnp.max(jnp.abs(b)) + 1e-9))

    assert out_f32.shape == (num_nodes, num_heads * out_channels)
    assert out_bf16.shape == (num_nodes, num_heads * out_channels)
    assert nerr(out_f32, ref) < 1e-2, ("f32 mismatch", nerr(out_f32, ref))
    assert nerr(out_bf16, ref) < 3e-2, ("bf16 mismatch", nerr(out_bf16, ref))
    print("KERNEL_OK")
</pallas_src>

<mosaic_0001>
module attributes {stable_mosaic.version = 11 : i64} {
  func.func @_gat_kernel(%arg0: i32, %arg1: i32, %arg2: memref<128x128xf32, #tpu.memory_space<vmem>>, %arg3: memref<32x128xi8, #tpu.memory_space<vmem>>, %arg4: memref<1x128xf32, #tpu.memory_space<vmem>>, %arg5: memref<128x128xf32, #tpu.memory_space<vmem>>, %arg6: memref<32x128xf32, #tpu.memory_space<vmem>>, %arg7: memref<32x128xf32, #tpu.memory_space<vmem>>) attributes {dimension_semantics = [#tpu.dimension_semantics<parallel>, #tpu.dimension_semantics<arbitrary>], iteration_bounds = array<i64: 1, 1>, scalar_prefetch = 0 : i64, scratch_operands = 1 : i64, tpu.core_type = #tpu.core_type<tc>, window_params = [{pipeline_mode = #tpu.pipeline_mode<synchronous>, transform_indices = @transform_0, window_bounds = array<i64: 128, 128>}, {transform_indices = @transform_1, window_bounds = array<i64: 32, 128>}, {pipeline_mode = #tpu.pipeline_mode<synchronous>, transform_indices = @transform_2, window_bounds = array<i64: 1, 128>}, {pipeline_mode = #tpu.pipeline_mode<synchronous>, transform_indices = @transform_3, window_bounds = array<i64: 128, 128>}, {transform_indices = @transform_4, window_bounds = array<i64: 32, 128>}]} {
    %c0_i32 = arith.constant 0 : i32
    %0 = arith.cmpi eq, %arg1, %c0_i32 : i32
    %1 = arith.extui %0 : i1 to i32
    %c0_i32_0 = arith.constant 0 : i32
    %2 = arith.cmpi ne, %1, %c0_i32_0 : i32
    scf.if %2 {
      %cst_9 = arith.constant 0.000000e+00 : f32
      %16 = vector.broadcast %cst_9 : f32 to vector<32x128xf32>
      %c0_10 = arith.constant 0 : index
      %c0_11 = arith.constant 0 : index
      %17 = vector.load %arg7[%c0_10, %c0_11] : memref<32x128xf32, #tpu.memory_space<vmem>>, vector<32x128xf32>
      tpu.vector_store %arg7[%c0_10, %c0_11], %16 {strides = array<i32>} : memref<32x128xf32, #tpu.memory_space<vmem>>, vector<32x128xf32>,
    } else {
    }
    %c0 = arith.constant 0 : index
    %c0_1 = arith.constant 0 : index
    %3 = vector.load %arg3[%c0, %c0_1] : memref<32x128xi8, #tpu.memory_space<vmem>>, vector<32x128xi8>
    %4 = arith.sitofp %3 : vector<32x128xi8> to vector<32x128xf32>
    %c128_i32 = arith.constant 128 : i32
    %5 = arith.muli %arg1, %c128_i32 : i32
    %6 = tpu.assume_multiple %5, 128 : i32
    %7 = arith.index_cast %6 : i32 to index
    %c0_2 = arith.constant 0 : index
    %8 = vector.load %arg2[%7, %c0_2] : memref<128x128xf32, #tpu.memory_space<vmem>>, vector<128x128xf32>
    %c0_3 = arith.constant 0 : index
    %c0_4 = arith.constant 0 : index
    %9 = vector.load %arg7[%c0_3, %c0_4] : memref<32x128xf32, #tpu.memory_space<vmem>>, vector<32x128xf32>
    %cst = arith.constant dense<0.000000e+00> : vector<32x128xf32>
    %10 = tpu.matmul %4, %8, %cst {dimension_numbers = #tpu.dot_dimension_numbers<[1], [0], [0], [1], [0, 0, 1, 1], [], []>} : vector<32x128xf32>, vector<128x128xf32>, vector<32x128xf32> -> vector<32x128xf32>
    %11 = arith.addf %9, %10 : vector<32x128xf32>
    %c0_5 = arith.constant 0 : index
    %c0_6 = arith.constant 0 : index
    %12 = vector.load %arg7[%c0_5, %c0_6] : memref<32x128xf32, #tpu.memory_space<vmem>>, vector<32x128xf32>
    tpu.vector_store %arg7[%c0_5, %c0_6], %11 {strides = array<i32>} : memref<32x128xf32, #tpu.memory_space<vmem>>, vector<32x128xf32>,
    %c0_i32_7 = arith.constant 0 : i32
    %13 = arith.cmpi eq, %arg1, %c0_i32_7 : i32
    %14 = arith.extui %13 : i1 to i32
    %c0_i32_8 = arith.constant 0 : i32
    %15 = arith.cmpi ne, %14, %c0_i32_8 : i32
    scf.if %15 {
      %c0_9 = arith.constant 0 : index
      %c0_10 = arith.constant 0 : index
      %16 = vector.load %arg7[%c0_9, %c0_10] : memref<32x128xf32, #tpu.memory_space<vmem>>, vector<32x128xf32>
      %17 = vector.extract_strided_slice %16 {offsets = [0, 8], sizes = [32, 1], strides = [1, 1]} : vector<32x128xf32> to vector<32x1xf32>
      %cst_11 = arith.constant 0.000000e+00 : f32
      %18 = vector.broadcast %cst_11 : f32 to vector<32x1xf32>
      %19 = arith.cmpf ogt, %17, %18 : vector<32x1xf32>
      %cst_12 = arith.constant 1.000000e+00 : f32
      %20 = vector.broadcast %cst_12 : f32 to vector<32x1xf32>
      %21 = arith.maximumf %17, %20 : vector<32x1xf32>
      %cst_13 = arith.constant 1.000000e+00 : f32
      %22 = vector.broadcast %cst_13 : f32 to vector<32x1xf32>
      %23 = arith.divf %22, %21 : vector<32x1xf32>
      %cst_14 = arith.constant 0.000000e+00 : f32
      %24 = vector.broadcast %cst_14 : f32 to vector<32x1xf32>
      %25 = arith.select %19, %23, %24 : vector<32x1xi1>, vector<32x1xf32>
      %cst_15 = arith.constant 0.000000e+00 : f32
      %cst_16 = arith.constant 6.250000e-02 : f32
      %26 = vector.broadcast %cst_15 : f32 to vector<32x1xf32>
      %27 = vector.broadcast %cst_16 : f32 to vector<32x1xf32>
      %28 = arith.select %19, %26, %27 : vector<32x1xi1>, vector<32x1xf32>
      %29 = vector.broadcast %25 : vector<32x1xf32> to vector<32x128xf32>
      %30 = arith.mulf %16, %29 : vector<32x128xf32>
      %c0_17 = arith.constant 0 : index
      %c0_18 = arith.constant 0 : index
      %31 = vector.load %arg4[%c0_17, %c0_18] : memref<1x128xf32, #tpu.memory_space<vmem>>, vector<1x128xf32>
      %32 = vector.broadcast %28 : vector<32x1xf32> to vector<32x128xf32>
      %33 = vector.broadcast %31 : vector<1x128xf32> to vector<32x128xf32>
      %34 = arith.mulf %32, %33 : vector<32x128xf32>
      %35 = arith.addf %30, %34 : vector<32x128xf32>
      %c0_19 = arith.constant 0 : index
      %c0_20 = arith.constant 0 : index
      %36 = vector.load %arg5[%c0_19, %c0_20] : memref<128x128xf32, #tpu.memory_space<vmem>>, vector<128x128xf32>
      %cst_21 = arith.constant dense<0.000000e+00> : vector<32x128xf32>
      %37 = tpu.matmul %35, %36, %cst_21 {dimension_numbers = #tpu.dot_dimension_numbers<[1], [0], [0], [1], [0, 0, 1, 1], [], []>} : vector<32x128xf32>, vector<128x128xf32>, vector<32x128xf32> -> vector<32x128xf32>
      %c0_22 = arith.constant 0 : index
      %c0_23 = arith.constant 0 : index
      %38 = vector.load %arg6[%c0_22, %c0_23] : memref<32x128xf32, #tpu.memory_space<vmem>>, vector<32x128xf32>
      tpu.vector_store %arg6[%c0_22, %c0_23], %37 {strides = array<i32>} : memref<32x128xf32, #tpu.memory_space<vmem>>, vector<32x128xf32>,
    } else {
    }
    return
  }
  func.func @transform_0(%arg0: i32, %arg1: i32) -> (i32, i32) {
    %c0_i32 = arith.constant 0 : i32
    %c0_i32_0 = arith.constant 0 : i32
    %c0_i32_1 = arith.constant 0 : i32
    return %c0_i32, %c0_i32_0 : i32, i32
  }
  func.func @transform_1(%arg0: i32, %arg1: i32) -> (i32, i32) {
    %c0_i32 = arith.constant 0 : i32
    return %arg0, %arg1 : i32, i32
  }
  func.func @transform_2(%arg0: i32, %arg1: i32) -> (i32, i32) {
    %c0_i32 = arith.constant 0 : i32
    %c0_i32_0 = arith.constant 0 : i32
    %c0_i32_1 = arith.constant 0 : i32
    return %c0_i32, %c0_i32_0 : i32, i32
  }
  func.func @transform_3(%arg0: i32, %arg1: i32) -> (i32, i32) {
    %c0_i32 = arith.constant 0 : i32
    %c0_i32_0 = arith.constant 0 : i32
    %c0_i32_1 = arith.constant 0 : i32
    return %c0_i32, %c0_i32_0 : i32, i32
  }
  func.func @transform_4(%arg0: i32, %arg1: i32) -> (i32, i32) {
    %c0_i32 = arith.constant 0 : i32
    %c0_i32_0 = arith.constant 0 : i32
    return %arg0, %c0_i32 : i32, i32
  }
}

</mosaic_0001>

<llo_original>
// kernel: tpu_custom_call.1
$region0: #{tpu_custom_call.1}
  #allocation0 [shape = 'u32[]', space=smem, size = 0x4, offset = 0x4, fixed_abs, tag = 'smem constant byte address 0x4 - core index']
  #allocation1 [shape = 'u32[72,128]{1,0:T(1,128)}', space=vmem, size = 0x9000, scoped, tag = 'internal scratch']
  #allocation2 [shape = 'f32[32,128]{1,0:T(8,128)}', space=vmem, size = 0x4000, scoped, tag = 'scratch operand']
  %s0 = inlined_call_operand.hbm [shape: f32[128,128], index: 0, kind: input, shape index: {}]
  %s1 = inlined_call_operand.hbm [shape: s8[32,128], index: 1, kind: input, shape index: {}]
  %s2 = inlined_call_operand.vmem [shape: f32[1,128], index: 2, kind: input, shape index: {}]
  %s3 = inlined_call_operand.hbm [shape: f32[128,128], index: 3, kind: input, shape index: {}]
  %s4 = inlined_call_operand.hbm [shape: f32[32,128], index: 4, kind: output, shape index: {}]
  %s5 = sld [smem:[#allocation0]]
  $region46: #{tpu_custom_call.1} parent=0
    _
  %s7 = ssub.s32 1, %s5
  %s8 = scalar_select 0, %s7, %s5
  $region1: #{tpu_custom_call.1} parent=0
    #allocation3 [shape = 'u8[65536]{0}', space=vmem, size = 0x10000, scoped, tag = 'input window, operand 0, single buffered']
    #allocation4 [shape = 's32[1]{0}', space=sflag, size = 0x4, scoped, tag = 'scoped memory for tpu_custom_call.1']
    #allocation5 [shape = 's32[1]{0}', space=sflag, size = 0x4, scoped, tag = 'scoped memory for tpu_custom_call.1']
    #allocation6 [shape = 'u8[4096]{0}', space=vmem, size = 0x1000, scoped, tag = 'input window, operand 1, single buffered']
    #allocation7 [shape = 's32[1]{0}', space=sflag, size = 0x4, scoped, tag = 'scoped memory for tpu_custom_call.1']
    #allocation8 [shape = 'u8[65536]{0}', space=vmem, size = 0x10000, scoped, tag = 'input window, operand 3, single buffered']
    #allocation9 [shape = 'u8[16384]{0}', space=vmem, size = 0x4000, scoped, tag = 'output window, operand 0, single buffered']
    %9 = vsyncpa [#allocation4], 0
    %10 = vsyncpa [#allocation7], 0
    %11 = vsyncpa [#allocation5], 0
    // Predicated region
    $region2: #{tpu_custom_call.1} parent=1 // pred_check
      _
    $region3: #{tpu_custom_call.1} parent=1 // pred_check_branch
      %13 = sbr.rel (0) target = $region5
    $region4: #{tpu_custom_call.1} parent=1 // pred_region
      %15 = vsyncadd [#allocation4], 0
      %s16 = sshll.u32 %s0, 4
      %s17 = int_to_ptr.hbm [resolvable:$true] %s16
      %s18 = sshll.u32 [#allocation3], 4
      %s19 = int_to_ptr.vmem [resolvable:$true] %s18
      %24 = dma.hbm_to_vmem [thread:$0]  %s17, 2048, %s19, [#allocation4], 128, 128, 8
    $region5: #{tpu_custom_call.1} parent=1 // pred_fallthru
      _
    // Predicated region
    $region6: #{tpu_custom_call.1} parent=1 // pred_check
      _
    $region7: #{tpu_custom_call.1} parent=1 // pred_check_branch
      %26 = sbr.rel (0) target = $region9
    $region8: #{tpu_custom_call.1} parent=1 // pred_region
      %28 = vsyncadd [#allocation7], 0
      %s30 = sshll.u32 %s1, 4
      %s31 = int_to_ptr.hbm [resolvable:$true] %s30
      %s32 = sshll.u32 [#allocation6], 4
      %s33 = int_to_ptr.vmem [resolvable:$true] %s32
      %35 = dma.hbm_to_vmem [thread:$0]  %s31, 128, %s33, [#allocation7]
    $region9: #{tpu_custom_call.1} parent=1 // pred_fallthru
      _
    // Predicated region
    $region10: #{tpu_custom_call.1} parent=1 // pred_check
      _
    $region11: #{tpu_custom_call.1} parent=1 // pred_check_branch
      %37 = sbr.rel (0) target = $region13
    $region12: #{tpu_custom_call.1} parent=1 // pred_region
      _
    $region13: #{tpu_custom_call.1} parent=1 // pred_fallthru
      _
    // Predicated region
    $region14: #{tpu_custom_call.1} parent=1 // pred_check
      _
    $region15: #{tpu_custom_call.1} parent=1 // pred_check_branch
      %39 = sbr.rel (0) target = $region17
    $region16: #{tpu_custom_call.1} parent=1 // pred_region
      %41 = vsyncadd [#allocation7], 0
      %s42 = sshll.u32 %s3, 4
      %s43 = int_to_ptr.hbm [resolvable:$true] %s42
      %s44 = sshll.u32 [#allocation8], 4
      %s45 = int_to_ptr.vmem [resolvable:$true] %s44
      %50 = dma.hbm_to_vmem [thread:$0]  %s43, 2048, %s45, [#allocation7], 128, 128, 8
    $region17: #{tpu_custom_call.1} parent=1 // pred_fallthru
      _
    // Predicated region
    $region18: #{tpu_custom_call.1} parent=1 // pred_check
      _
    $region19: #{tpu_custom_call.1} parent=1 // pred_check_branch
      %52 = sbr.rel (0) target = $region21
    $region20: #{tpu_custom_call.1} parent=1 // pred_region
      %54 = dma.done [#allocation4], 2048
    $region21: #{tpu_custom_call.1} parent=1 // pred_fallthru
      _
    // Predicated region
    $region22: #{tpu_custom_call.1} parent=1 // pred_check
      _
    $region23: #{tpu_custom_call.1} parent=1 // pred_check_branch
      %56 = sbr.rel (0) target = $region25
    $region24: #{tpu_custom_call.1} parent=1 // pred_region
      %58 = dma.done [#allocation7], 128
    $region25: #{tpu_custom_call.1} parent=1 // pred_fallthru
      _
    // Predicated region
    $region26: #{tpu_custom_call.1} parent=1 // pred_check
      _
    $region27: #{tpu_custom_call.1} parent=1 // pred_check_branch
      %60 = sbr.rel (0) target = $region29
    $region28: #{tpu_custom_call.1} parent=1 // pred_region
      %62 = dma.done [#allocation7], 2048
    $region29: #{tpu_custom_call.1} parent=1 // pred_fallthru
      _
    %p63 = scmp.eq.s32.totalorder 0, 0
    // Predicated region
    $region30: #{tpu_custom_call.1} parent=1 // pred_check
      %p64 = pneg %p63
    $region31: #{tpu_custom_call.1} parent=1 // pred_check_branch
      %66 = sbr.rel (%p64) target = $region33
    $region32: #{tpu_custom_call.1} parent=1 // pred_region
      %67 = vst [vmem:[#allocation2] sm:$0xff] 0.0
      %68 = vst [vmem:[#allocation2 + $0x8] sm:$0xff] 0.0
      %69 = vst [vmem:[#allocation2 + $0x10] sm:$0xff] 0.0
      %70 = vst [vmem:[#allocation2 + $0x18] sm:$0xff] 0.0
    $region33: #{tpu_custom_call.1} parent=1 // pred_fallthru
      _
    %v71 = vld [vmem:[#allocation6] sm:$0xff]
    %v72 = vunpack.c.0.s8 %v71
    %v73 = vunpack.c.1.s8 %v71
    %v74 = vunpack.c.2.s8 %v71
    %v75 = vunpack.c.3.s8 %v71
    %v76 = vcvt.s32.f32 %v72
    %v77 = vcvt.s32.f32 %v73
    %v78 = vcvt.s32.f32 %v74
    %v79 = vcvt.s32.f32 %v75
    %s80 = smul.u32 0, 128
    %s81 = scalar_lea.vmem [#allocation3], %s80
    %v82 = vld [vmem:[%s81] sm:$0xff]
    %v83 = vld [vmem:[%s81 + $0x8] sm:$0xff]
    %v84 = vld [vmem:[%s81 + $0x10] sm:$0xff]
    %v85 = vld [vmem:[%s81 + $0x18] sm:$0xff]
    %v86 = vld [vmem:[%s81 + $0x20] sm:$0xff]
    %v87 = vld [vmem:[%s81 + $0x28] sm:$0xff]
    %v88 = vld [vmem:[%s81 + $0x30] sm:$0xff]
    %v89 = vld [vmem:[%s81 + $0x38] sm:$0xff]
    %v90 = vld [vmem:[%s81 + $0x40] sm:$0xff]
    %v91 = vld [vmem:[%s81 + $0x48] sm:$0xff]
    %v92 = vld [vmem:[%s81 + $0x50] sm:$0xff]
    %v93 = vld [vmem:[%s81 + $0x58] sm:$0xff]
    %v94 = vld [vmem:[%s81 + $0x60] sm:$0xff]
    %v95 = vld [vmem:[%s81 + $0x68] sm:$0xff]
    %v96 = vld [vmem:[%s81 + $0x70] sm:$0xff]
    %v97 = vld [vmem:[%s81 + $0x78] sm:$0xff]
    %v98 = vld [vmem:[#allocation2] sm:$0xff]
    %v99 = vld [vmem:[#allocation2 + $0x8] sm:$0xff]
    %v100 = vld [vmem:[#allocation2 + $0x10] sm:$0xff]
    %v101 = vld [vmem:[#allocation2 + $0x18] sm:$0xff]
    %102 = vmatpush.msra.mxu0 %v97
    %103 = vmatpush.msra.mxu0 %v96
    %104 = vmatpush.msra.mxu0 %v95
    %105 = vmatpush.msra.mxu0 %v94
    %106 = vmatpush.msra.mxu0 %v93
    %107 = vmatpush.msra.mxu0 %v92
    %108 = vmatpush.msra.mxu0 %v91
    %109 = vmatpush.msra.mxu0 %v90
    %110 = vmatpush.msra.mxu0 %v89
    %111 = vmatpush.msra.mxu0 %v88
    %112 = vmatpush.msra.mxu0 %v87
    %113 = vmatpush.msra.mxu0 %v86
    %114 = vmatpush.msra.mxu0 %v85
    %115 = vmatpush.msra.mxu0 %v84
    %116 = vmatpush.msra.mxu0 %v83
    %117 = vmatpush.msra.mxu0 %v82
    %118 = vmatmul.f32.gmra.mxu0 %v76
    %v119 = vpop.f32.mrf.mxu0
    %v120 = vadd.f32 0.0, %v119
    %121 = vmatmul.f32.gmra.mxu0 %v77
    %v122 = vpop.f32.mrf.mxu0
    %v123 = vadd.f32 0.0, %v122
    %124 = vmatmul.f32.gmra.mxu0 %v78
    %v125 = vpop.f32.mrf.mxu0
    %v126 = vadd.f32 0.0, %v125
    %127 = vmatmul.f32.gmra.mxu0 %v79
    %v128 = vpop.f32.mrf.mxu0
    %v129 = vadd.f32 0.0, %v128
    %130 = vdwg.mxu0
    %v131 = vadd.f32 %v98, %v120
    %v132 = vadd.f32 %v99, %v123
    %v133 = vadd.f32 %v100, %v126
    %v134 = vadd.f32 %v101, %v129
    %135 = vst [vmem:[#allocation2] sm:$0xff] %v131
    %136 = vst [vmem:[#allocation2 + $0x8] sm:$0xff] %v132
    %137 = vst [vmem:[#allocation2 + $0x10] sm:$0xff] %v133
    %138 = vst [vmem:[#allocation2 + $0x18] sm:$0xff] %v134
    // Predicated region
    $region34: #{tpu_custom_call.1} parent=1 // pred_check
      %p139 = pneg %p63
    $region35: #{tpu_custom_call.1} parent=1 // pred_check_branch
      %141 = sbr.rel (%p139) target = $region37
    $region36: #{tpu_custom_call.1} parent=1 // pred_region
      %v142 = vld [vmem:[#allocation2] sm:$0xff]
      %v143 = vld [vmem:[#allocation2 + $0x8] sm:$0xff]
      %v144 = vld [vmem:[#allocation2 + $0x10] sm:$0xff]
      %v145 = vld [vmem:[#allocation2 + $0x18] sm:$0xff]
      %vm146 = vcmp.gt.f32.partialorder %v142, 0.0
      %vm147 = vcmp.gt.f32.partialorder %v143, 0.0
      %vm148 = vcmp.gt.f32.partialorder %v144, 0.0
      %vm149 = vcmp.gt.f32.partialorder %v145, 0.0
      %v150 = vmax.f32 %v142, 1.0
      %v151 = vmax.f32 %v143, 1.0
      %v152 = vmax.f32 %v144, 1.0
      %v153 = vmax.f32 %v145, 1.0
      %v154 = vrcp.pop %v150
      %v155 = vmul.f32 %v150, %v154
      %v156 = vsub.f32 1.0, %v155
      %v157 = vmul.f32 %v154, %v156
      %v158 = vadd.f32 %v154, %v157
      %vm159 = vweird.f32 %v150
      %vm160 = vweird.f32 %v154
      %vm161 = vmor %vm159, %vm160
      %v162 = vsel %vm161, %v154, %v158
      %v163 = vand.u32 2147483647, %v150
      %vm164 = vcmp.eq.f32.partialorder %v163, 8.507059e+37
      %v165 = vand.u32 %v150, 2147483648
      %v166 = vor.u32 1.1754944e-38, %v165
      %v167 = vsel %vm164, %v166, %v162
      %v168 = vmul.f32 1.0, %v167
      %v169 = vrcp.pop %v151
      %v170 = vmul.f32 %v151, %v169
      %v171 = vsub.f32 1.0, %v170
      %v172 = vmul.f32 %v169, %v171
      %v173 = vadd.f32 %v169, %v172
      %vm174 = vweird.f32 %v151
      %vm175 = vweird.f32 %v169
      %vm176 = vmor %vm174, %vm175
      %v177 = vsel %vm176, %v169, %v173
      %v178 = vand.u32 2147483647, %v151
      %vm179 = vcmp.eq.f32.partialorder %v178, 8.507059e+37
      %v180 = vand.u32 %v151, 2147483648
      %v181 = vor.u32 1.1754944e-38, %v180
      %v182 = vsel %vm179, %v181, %v177
      %v183 = vmul.f32 1.0, %v182
      %v184 = vrcp.pop %v152
      %v185 = vmul.f32 %v152, %v184
      %v186 = vsub.f32 1.0, %v185
      %v187 = vmul.f32 %v184, %v186
      %v188 = vadd.f32 %v184, %v187
      %vm189 = vweird.f32 %v152
      %vm190 = vweird.f32 %v184
      %vm191 = vmor %vm189, %vm190
      %v192 = vsel %vm191, %v184, %v188
      %v193 = vand.u32 2147483647, %v152
      %vm194 = vcmp.eq.f32.partialorder %v193, 8.507059e+37
      %v195 = vand.u32 %v152, 2147483648
      %v196 = vor.u32 1.1754944e-38, %v195
      %v197 = vsel %vm194, %v196, %v192
      %v198 = vmul.f32 1.0, %v197
      %v199 = vrcp.pop %v153
      %v200 = vmul.f32 %v153, %v199
      %v201 = vsub.f32 1.0, %v200
      %v202 = vmul.f32 %v199, %v201
      %v203 = vadd.f32 %v199, %v202
      %vm204 = vweird.f32 %v153
      %vm205 = vweird.f32 %v199
      %vm206 = vmor %vm204, %vm205
      %v207 = vsel %vm206, %v199, %v203
      %v208 = vand.u32 2147483647, %v153
      %vm209 = vcmp.eq.f32.partialorder %v208, 8.507059e+37
      %v210 = vand.u32 %v153, 2147483648
      %v211 = vor.u32 1.1754944e-38, %v210
      %v212 = vsel %vm209, %v211, %v207
      %v213 = vmul.f32 1.0, %v212
      %v214 = vsel %vm146, %v168, 0.0
      %v215 = vsel %vm147, %v183, 0.0
      %v216 = vsel %vm148, %v198, 0.0
      %v217 = vsel %vm149, %v213, 0.0
      %v218 = vsel %vm146, 0.0, 0.0625
      %v219 = vsel %vm147, 0.0, 0.0625
      %v220 = vsel %vm148, 0.0, 0.0625
      %v221 = vsel %vm149, 0.0, 0.0625
      %223 = vset.pattern.permute.xlu0 8
      %224 = vperm.xlu0 %223, %v214
      %v225 = vpop.permute.xlu0 %224
      %228 = vset.pattern.permute.xlu0 8
      %229 = vperm.xlu0 %228, %v215
      %v230 = vpop.permute.xlu0 %229
      %233 = vset.pattern.permute.xlu0 8
      %234 = vperm.xlu0 %233, %v216
      %v235 = vpop.permute.xlu0 %234
      %238 = vset.pattern.permute.xlu0 8
      %239 = vperm.xlu0 %238, %v217
      %v240 = vpop.permute.xlu0 %239
      %v242 = vmul.f32 %v142, %v225
      %v243 = vmul.f32 %v143, %v230
      %v244 = vmul.f32 %v144, %v235
      %v245 = vmul.f32 %v145, %v240
      %v246 = vld [vmem:[%s2] sm:$0x1]
      %248 = vset.pattern.permute.xlu0 8
      %249 = vperm.xlu0 %248, %v218
      %v250 = vpop.permute.xlu0 %249
      %253 = vset.pattern.permute.xlu0 8
      %254 = vperm.xlu0 %253, %v219
      %v255 = vpop.permute.xlu0 %254
      %258 = vset.pattern.permute.xlu0 8
      %259 = vperm.xlu0 %258, %v220
      %v260 = vpop.permute.xlu0 %259
      %263 = vset.pattern.permute.xlu0 8
      %264 = vperm.xlu0 %263, %v221
      %v265 = vpop.permute.xlu0 %264
      %v268 = vperm.slane %v246, 0
      %v270 = vmul.f32 %v250, %v268
      %v271 = vmul.f32 %v255, %v268
      %v272 = vmul.f32 %v260, %v268
      %v273 = vmul.f32 %v265, %v268
      %v274 = vadd.f32 %v242, %v270
      %v275 = vadd.f32 %v243, %v271
      %v276 = vadd.f32 %v244, %v272
      %v277 = vadd.f32 %v245, %v273
      %v278 = vld [vmem:[#allocation8] sm:$0xff]
      %v279 = vld [vmem:[#allocation8 + $0x8] sm:$0xff]
      %v280 = vld [vmem:[#allocation8 + $0x10] sm:$0xff]
      %v281 = vld [vmem:[#allocation8 + $0x18] sm:$0xff]
      %v282 = vld [vmem:[#allocation8 + $0x20] sm:$0xff]
      %v283 = vld [vmem:[#allocation8 + $0x28] sm:$0xff]
      %v284 = vld [vmem:[#allocation8 + $0x30] sm:$0xff]
      %v285 = vld [vmem:[#allocation8 + $0x38] sm:$0xff]
      %v286 = vld [vmem:[#allocation8 + $0x40] sm:$0xff]
      %v287 = vld [vmem:[#allocation8 + $0x48] sm:$0xff]
      %v288 = vld [vmem:[#allocation8 + $0x50] sm:$0xff]
      %v289 = vld [vmem:[#allocation8 + $0x58] sm:$0xff]
      %v290 = vld [vmem:[#allocation8 + $0x60] sm:$0xff]
      %v291 = vld [vmem:[#allocation8 + $0x68] sm:$0xff]
      %v292 = vld [vmem:[#allocation8 + $0x70] sm:$0xff]
      %v293 = vld [vmem:[#allocation8 + $0x78] sm:$0xff]
      %294 = vmatpush.msra.mxu0 %v293
      %295 = vmatpush.msra.mxu0 %v292
      %296 = vmatpush.msra.mxu0 %v291
      %297 = vmatpush.msra.mxu0 %v290
      %298 = vmatpush.msra.mxu0 %v289
      %299 = vmatpush.msra.mxu0 %v288
      %300 = vmatpush.msra.mxu0 %v287
      %301 = vmatpush.msra.mxu0 %v286
      %302 = vmatpush.msra.mxu0 %v285
      %303 = vmatpush.msra.mxu0 %v284
      %304 = vmatpush.msra.mxu0 %v283
      %305 = vmatpush.msra.mxu0 %v282
      %306 = vmatpush.msra.mxu0 %v281
      %307 = vmatpush.msra.mxu0 %v280
      %308 = vmatpush.msra.mxu0 %v279
      %309 = vmatpush.msra.mxu0 %v278
      %310 = vmatmul.f32.gmra.mxu0 %v274
      %v311 = vpop.f32.mrf.mxu0
      %v312 = vadd.f32 0.0, %v311
      %313 = vmatmul.f32.gmra.mxu0 %v275
      %v314 = vpop.f32.mrf.mxu0
      %v315 = vadd.f32 0.0, %v314
      %316 = vmatmul.f32.gmra.mxu0 %v276
      %v317 = vpop.f32.mrf.mxu0
      %v318 = vadd.f32 0.0, %v317
      %319 = vmatmul.f32.gmra.mxu0 %v277
      %v320 = vpop.f32.mrf.mxu0
      %v321 = vadd.f32 0.0, %v320
      %322 = vdwg.mxu0
      %323 = vst [vmem:[#allocation9] sm:$0xff] %v312
      %324 = vst [vmem:[#allocation9 + $0x8] sm:$0xff] %v315
      %325 = vst [vmem:[#allocation9 + $0x10] sm:$0xff] %v318
      %326 = vst [vmem:[#allocation9 + $0x18] sm:$0xff] %v321
    $region37: #{tpu_custom_call.1} parent=1 // pred_fallthru
      _
    // Predicated region
    $region38: #{tpu_custom_call.1} parent=1 // pred_check
      _
    $region39: #{tpu_custom_call.1} parent=1 // pred_check_branch
      %328 = sbr.rel (0) target = $region41
    $region40: #{tpu_custom_call.1} parent=1 // pred_region
      %330 = vsyncadd [#allocation5], 0
      %s331 = sshll.u32 [#allocation9], 4
      %s332 = int_to_ptr.vmem [resolvable:$true] %s331
      %s333 = sshll.u32 %s4, 4
      %s334 = int_to_ptr.hbm [resolvable:$true] %s333
      %339 = dma.vmem_to_hbm [thread:$0]  %s332, 512, %s334, [#allocation5], 128, 128, 8
    $region41: #{tpu_custom_call.1} parent=1 // pred_fallthru
      _
    // Predicated region
    $region42: #{tpu_custom_call.1} parent=1 // pred_check
      _
    $region43: #{tpu_custom_call.1} parent=1 // pred_check_branch
      %341 = sbr.rel (0) target = $region45
    $region44: #{tpu_custom_call.1} parent=1 // pred_region
      %343 = dma.done [#allocation5], 512
    $region45: #{tpu_custom_call.1} parent=1 // pred_fallthru
      _
    %344 = vsyncpa [#allocation4], 1
    %345 = vsyncpa [#allocation7], 1
    %346 = vsyncpa [#allocation5], 1

</llo_original>
